<compile_context>
chip_gen: v7x
topology: tpu7x:2x2x1
jax: 0.10.0
libtpu: 0.0.40
codegen_flags: <defaults>
</compile_context>

<pallas_src>
import jax
import jax.numpy as jnp
from jax.experimental import pallas as pl
from jax.experimental.pallas import tpu as pltpu


def _gfa_kernel(off_ref,                    # SMEM (B, 2): per-batch logit offsets
                x_ir_ref, x_vi_ref,         # VMEM (1, C, T)
                a_ir_ref, a_vi_ref,         # VMEM (2, C): folded conv-chain weights
                out_ref):                   # VMEM (1, C, T)
    b = pl.program_id(0)

    x_ir = x_ir_ref[0]                      # (C, T)
    x_vi = x_vi_ref[0]                      # (C, T)

    # Folded 1x1-conv chain: logits for the two select channels, (2, T).
    logits = (jnp.dot(a_ir_ref[...], x_ir, preferred_element_type=jnp.float32)
              + jnp.dot(a_vi_ref[...], x_vi, preferred_element_type=jnp.float32))

    # Per-batch global-mean contribution is a scalar per select channel (SMEM).
    prob_ir = jax.nn.sigmoid(logits[0:1, :] + off_ref[b, 0])   # (1, T)
    prob_vi = jax.nn.sigmoid(logits[1:2, :] + off_ref[b, 1])   # (1, T)

    # Blend: (1, T) sublane-broadcast over (C, T); lane-dense store.
    out_ref[0] = x_ir * prob_ir + x_vi * prob_vi


def gfa_forward(x_ir_nchw, x_vi_nchw, params, hw_tile=4096):
    """x_*_nchw: (B, C, H, W) float32.  Returns (B, C, H, W)."""
    B, C, H, W = x_ir_nchw.shape
    HW = H * W

    # NCHW -> (B, C, HW): a pure reshape (contiguous), no HBM transpose pass.
    x_ir = x_ir_nchw.reshape(B, C, HW)
    x_vi = x_vi_nchw.reshape(B, C, HW)

    # ---- fold the purely linear 1x1-conv chain (tiny one-time matmuls) ----
    # weights stored as (Cin, Cout); valid because GFA has no activation
    # between conv_ir/conv_vi, conv_fusion and spatial_select.
    a_ir = (params["w_ir"] @ params["w_fus_ir"] @ params["w_sel_fuse"]).T   # (2, C)
    a_vi = (params["w_vi"] @ params["w_fus_vi"] @ params["w_sel_fuse"]).T   # (2, C)
    g_ir = params["w_ir"] @ params["w_sel_irg"]                             # (C, 2)
    g_vi = params["w_vi"] @ params["w_sel_vig"]                             # (C, 2)
    bias = params["b_fus"] @ params["w_sel_fuse"] + params["b_sel"]         # (1, 2)

    # ---- per-batch global-mean term: tiny XLA reduce, shape (B, 2) ----
    off = (jnp.mean(x_ir, axis=2) @ g_ir
           + jnp.mean(x_vi, axis=2) @ g_vi
           + bias).astype(jnp.float32)

    # ---- HW tiling: lane-dense tiles (multiple of 128) or the full extent ----
    if HW <= hw_tile:
        T = HW                                   # single full-extent tile (legal)
    else:
        T = max(128, (hw_tile // 128) * 128)     # multiple of 128; grid overhangs OK
    num_t = pl.cdiv(HW, T)

    x_spec = pl.BlockSpec((1, C, T), lambda b, t, off_ref: (b, 0, t))
    w_spec = pl.BlockSpec((2, C), lambda b, t, off_ref: (0, 0))

    cost = pl.CostEstimate(
        flops=B * HW * (8 * C + 8),
        transcendentals=2 * B * HW,
        bytes_accessed=3 * B * C * HW * 4 + 2 * B * C * HW * 4,
    )

    out = pl.pallas_call(
        _gfa_kernel,
        out_shape=jax.ShapeDtypeStruct((B, C, HW), jnp.float32),
        grid_spec=pltpu.PrefetchScalarGridSpec(
            num_scalar_prefetch=1,               # `off` lands in SMEM
            grid=(B, num_t),
            in_specs=[x_spec, x_spec, w_spec, w_spec],
            out_specs=x_spec,
        ),
        compiler_params=pltpu.CompilerParams(
            dimension_semantics=("parallel", "parallel")),
        cost_estimate=cost,
    )(off, x_ir, x_vi, a_ir, a_vi)

    return out.reshape(B, C, H, W)


def init_params(key, C):
    """Deterministic synthetic parameters matching GFA.__init__ shapes.

    PyTorch conv weights (Cout, Cin, 1, 1) are stored transposed as
    (Cin, Cout) so that the per-pixel conv is `x_row @ W`.
    """
    C2, C4, C6 = 2 * C, 4 * C, 6 * C
    ks = jax.random.split(key, 6)
    s = 0.1
    w_ir = s * jax.random.normal(ks[0], (C, C2), jnp.float32)         # conv_ir
    w_vi = s * jax.random.normal(ks[1], (C, C2), jnp.float32)         # conv_vi
    w_fus = s * jax.random.normal(ks[2], (C4, C2), jnp.float32)       # conv_fusion
    b_fus = s * jax.random.normal(ks[3], (1, C2), jnp.float32)
    w_sel = s * jax.random.normal(ks[4], (C6, 2), jnp.float32)        # spatial_select
    b_sel = s * jax.random.normal(ks[5], (1, 2), jnp.float32)
    return {
        "w_ir": w_ir,
        "w_vi": w_vi,
        "w_fus_ir": w_fus[:C2],         # acts on ir half of the concat
        "w_fus_vi": w_fus[C2:],         # acts on vi half of the concat
        "b_fus": b_fus,
        "w_sel_fuse": w_sel[:C2],
        "w_sel_irg": w_sel[C2:C4],
        "w_sel_vig": w_sel[C4:],
        "b_sel": b_sel,
    }


def gfa_reference(x_ir, x_vi, p):
    """Pure-JAX reference (NCHW), mirroring the PyTorch forward (unfused)."""
    B, C, H, W = x_ir.shape

    def conv1x1(x, w_t, b=None):       # w_t: (Cin, Cout)
        y = jnp.einsum("bchw,cd->bdhw", x, w_t)
        if b is not None:
            y = y + b.reshape(1, -1, 1, 1)
        return y

    ir = conv1x1(x_ir, p["w_ir"])
    vi = conv1x1(x_vi, p["w_vi"])
    w_fus = jnp.concatenate([p["w_fus_ir"], p["w_fus_vi"]], axis=0)
    fuse = conv1x1(jnp.concatenate([ir, vi], 1), w_fus, p["b_fus"][0])
    vi_g = jnp.broadcast_to(vi.mean((2, 3), keepdims=True), vi.shape)
    ir_g = jnp.broadcast_to(ir.mean((2, 3), keepdims=True), ir.shape)
    w_sel = jnp.concatenate([p["w_sel_fuse"], p["w_sel_irg"], p["w_sel_vig"]], 0)
    logits = conv1x1(jnp.concatenate([fuse, ir_g, vi_g], 1), w_sel, p["b_sel"][0])
    prob = jax.nn.sigmoid(logits)
    return x_ir * prob[:, :1] + x_vi * prob[:, 1:]


if __name__ == "__main__":
    B, C, H, W = 2, 4, 16, 16
    key = jax.random.PRNGKey(0)
    k_ir, k_vi, k_p = jax.random.split(key, 3)
    x_ir = jax.random.normal(k_ir, (B, C, H, W), jnp.float32)
    x_vi = jax.random.normal(k_vi, (B, C, H, W), jnp.float32)
    params = init_params(k_p, C)

    # hw_tile=128 exercises the multi-tile (B, HW//T) grid even at toy size.
    out = gfa_forward(x_ir, x_vi, params, hw_tile=128)
    out = jax.block_until_ready(out)

    ref = jax.block_until_ready(gfa_reference(x_ir, x_vi, params))
    assert out.shape == (B, C, H, W)
    assert jnp.allclose(out, ref, atol=1e-4, rtol=1e-4), "mismatch vs reference"

    print("KERNEL_OK")
</pallas_src>

<mosaic_0001>
module attributes {stable_mosaic.version = 11 : i64} {
  func.func @_gfa_kernel(%arg0: i32, %arg1: i32, %arg2: memref<2x2xf32, #tpu.memory_space<smem>>, %arg3: memref<1x4x128xf32, #tpu.memory_space<vmem>>, %arg4: memref<1x4x128xf32, #tpu.memory_space<vmem>>, %arg5: memref<2x4xf32, #tpu.memory_space<vmem>>, %arg6: memref<2x4xf32, #tpu.memory_space<vmem>>, %arg7: memref<1x4x128xf32, #tpu.memory_space<vmem>>) attributes {dimension_semantics = [#tpu.dimension_semantics<parallel>, #tpu.dimension_semantics<parallel>], iteration_bounds = array<i64: 2, 2>, scalar_prefetch = 1 : i64, scratch_operands = 0 : i64, tpu.core_type = #tpu.core_type<tc>, window_params = [{transform_indices = @transform_0, window_bounds = array<i64: 1, 4, 128>}, {transform_indices = @transform_1, window_bounds = array<i64: 1, 4, 128>}, {pipeline_mode = #tpu.pipeline_mode<synchronous>, transform_indices = @transform_2, window_bounds = array<i64: 2, 4>}, {pipeline_mode = #tpu.pipeline_mode<synchronous>, transform_indices = @transform_3, window_bounds = array<i64: 2, 4>}, {transform_indices = @transform_4, window_bounds = array<i64: 1, 4, 128>}]} {
    %c0 = arith.constant 0 : index
    %c0_0 = arith.constant 0 : index
    %c0_1 = arith.constant 0 : index
    %0 = vector.load %arg3[%c0, %c0_0, %c0_1] : memref<1x4x128xf32, #tpu.memory_space<vmem>>, vector<1x4x128xf32>
    %1 = vector.shape_cast %0 : vector<1x4x128xf32> to vector<4x128xf32>
    %c0_2 = arith.constant 0 : index
    %c0_3 = arith.constant 0 : index
    %c0_4 = arith.constant 0 : index
    %2 = vector.load %arg4[%c0_2, %c0_3, %c0_4] : memref<1x4x128xf32, #tpu.memory_space<vmem>>, vector<1x4x128xf32>
    %3 = vector.shape_cast %2 : vector<1x4x128xf32> to vector<4x128xf32>
    %c0_5 = arith.constant 0 : index
    %c0_6 = arith.constant 0 : index
    %4 = vector.load %arg5[%c0_5, %c0_6] : memref<2x4xf32, #tpu.memory_space<vmem>>, vector<2x4xf32>
    %cst = arith.constant dense<0.000000e+00> : vector<2x128xf32>
    %5 = tpu.matmul %4, %1, %cst {dimension_numbers = #tpu.dot_dimension_numbers<[1], [0], [0], [1], [0, 0, 1, 1], [], []>} : vector<2x4xf32>, vector<4x128xf32>, vector<2x128xf32> -> vector<2x128xf32>
    %c0_7 = arith.constant 0 : index
    %c0_8 = arith.constant 0 : index
    %6 = vector.load %arg6[%c0_7, %c0_8] : memref<2x4xf32, #tpu.memory_space<vmem>>, vector<2x4xf32>
    %cst_9 = arith.constant dense<0.000000e+00> : vector<2x128xf32>
    %7 = tpu.matmul %6, %3, %cst_9 {dimension_numbers = #tpu.dot_dimension_numbers<[1], [0], [0], [1], [0, 0, 1, 1], [], []>} : vector<2x4xf32>, vector<4x128xf32>, vector<2x128xf32> -> vector<2x128xf32>
    %8 = arith.addf %5, %7 : vector<2x128xf32>
    %9 = vector.extract_strided_slice %8 {offsets = [0, 0], sizes = [1, 128], strides = [1, 1]} : vector<2x128xf32> to vector<1x128xf32>
    %10 = arith.index_cast %arg0 : i32 to index
    %c0_10 = arith.constant 0 : index
    %11 = memref.load %arg2[%10, %c0_10] : memref<2x2xf32, #tpu.memory_space<smem>>
    %12 = vector.broadcast %11 : f32 to vector<1x128xf32>
    %13 = arith.addf %9, %12 : vector<1x128xf32>
    %14 = arith.negf %13 : vector<1x128xf32>
    %15 = math.exp %14 : vector<1x128xf32>
    %cst_11 = arith.constant 1.000000e+00 : f32
    %16 = vector.broadcast %cst_11 : f32 to vector<1x128xf32>
    %17 = arith.addf %16, %15 : vector<1x128xf32>
    %18 = arith.divf %16, %17 : vector<1x128xf32>
    %19 = vector.extract_strided_slice %8 {offsets = [1, 0], sizes = [1, 128], strides = [1, 1]} : vector<2x128xf32> to vector<1x128xf32>
    %20 = arith.index_cast %arg0 : i32 to index
    %c1 = arith.constant 1 : index
    %21 = memref.load %arg2[%20, %c1] : memref<2x2xf32, #tpu.memory_space<smem>>
    %22 = vector.broadcast %21 : f32 to vector<1x128xf32>
    %23 = arith.addf %19, %22 : vector<1x128xf32>
    %24 = arith.negf %23 : vector<1x128xf32>
    %25 = math.exp %24 : vector<1x128xf32>
    %cst_12 = arith.constant 1.000000e+00 : f32
    %26 = vector.broadcast %cst_12 : f32 to vector<1x128xf32>
    %27 = arith.addf %26, %25 : vector<1x128xf32>
    %28 = arith.divf %26, %27 : vector<1x128xf32>
    %29 = vector.broadcast %18 : vector<1x128xf32> to vector<4x128xf32>
    %30 = arith.mulf %1, %29 : vector<4x128xf32>
    %31 = vector.broadcast %28 : vector<1x128xf32> to vector<4x128xf32>
    %32 = arith.mulf %3, %31 : vector<4x128xf32>
    %33 = arith.addf %30, %32 : vector<4x128xf32>
    %c0_13 = arith.constant 0 : index
    %c0_14 = arith.constant 0 : index
    %c0_15 = arith.constant 0 : index
    %34 = vector.load %arg7[%c0_13, %c0_14, %c0_15] : memref<1x4x128xf32, #tpu.memory_space<vmem>>, vector<1x4x128xf32>
    %35 = vector.shape_cast %34 : vector<1x4x128xf32> to vector<4x128xf32>
    %36 = vector.shape_cast %33 : vector<4x128xf32> to vector<1x4x128xf32>
    tpu.vector_store %arg7[%c0_13, %c0_14, %c0_15], %36 {strides = array<i32>} : memref<1x4x128xf32, #tpu.memory_space<vmem>>, vector<1x4x128xf32>,
    return
  }
  func.func @transform_0(%arg0: i32, %arg1: i32, %arg2: memref<2x2xf32, #tpu.memory_space<smem>>) -> (i32, i32, i32) {
    %c0_i32 = arith.constant 0 : i32
    %c0_i32_0 = arith.constant 0 : i32
    return %arg0, %c0_i32, %arg1 : i32, i32, i32
  }
  func.func @transform_1(%arg0: i32, %arg1: i32, %arg2: memref<2x2xf32, #tpu.memory_space<smem>>) -> (i32, i32, i32) {
    %c0_i32 = arith.constant 0 : i32
    %c0_i32_0 = arith.constant 0 : i32
    return %arg0, %c0_i32, %arg1 : i32, i32, i32
  }
  func.func @transform_2(%arg0: i32, %arg1: i32, %arg2: memref<2x2xf32, #tpu.memory_space<smem>>) -> (i32, i32) {
    %c0_i32 = arith.constant 0 : i32
    %c0_i32_0 = arith.constant 0 : i32
    %c0_i32_1 = arith.constant 0 : i32
    return %c0_i32, %c0_i32_0 : i32, i32
  }
  func.func @transform_3(%arg0: i32, %arg1: i32, %arg2: memref<2x2xf32, #tpu.memory_space<smem>>) -> (i32, i32) {
    %c0_i32 = arith.constant 0 : i32
    %c0_i32_0 = arith.constant 0 : i32
    %c0_i32_1 = arith.constant 0 : i32
    return %c0_i32, %c0_i32_0 : i32, i32
  }
  func.func @transform_4(%arg0: i32, %arg1: i32, %arg2: memref<2x2xf32, #tpu.memory_space<smem>>) -> (i32, i32, i32) {
    %c0_i32 = arith.constant 0 : i32
    %c0_i32_0 = arith.constant 0 : i32
    return %arg0, %c0_i32, %arg1 : i32, i32, i32
  }
}

</mosaic_0001>

<llo_original>
// kernel: tpu_custom_call.1
$region0: #{tpu_custom_call.1}
  #allocation0 [shape = 'u32[]', space=smem, size = 0x4, offset = 0x4, fixed_abs, tag = 'smem constant byte address 0x4 - core index']
  #allocation1 [shape = 'u32[144,128]{1,0:T(1,128)}', space=vmem, size = 0x12000, scoped, tag = 'internal scratch']
  #allocation2 [shape = 's32[1]{0}', space=sflag, size = 0x4, scoped, tag = 'scoped memory for tpu_custom_call.1']
  #allocation3 [shape = 'u8[1024]{0}', space=smem, size = 0x400, scoped, tag = 'prefetched SMEM operand 0']
  %s0 = inlined_call_operand.hbm [shape: f32[2,2], index: 0, kind: input, shape index: {}]
  %s1 = inlined_call_operand.hbm [shape: f32[2,4,256], index: 1, kind: input, shape index: {}]
  %s2 = inlined_call_operand.hbm [shape: f32[2,4,256], index: 2, kind: input, shape index: {}]
  %s3 = inlined_call_operand.vmem [shape: f32[2,4], index: 3, kind: input, shape index: {}]
  %s4 = inlined_call_operand.vmem [shape: f32[2,4], index: 4, kind: input, shape index: {}]
  %s5 = inlined_call_operand.hbm [shape: f32[2,4,256], index: 5, kind: output, shape index: {}]
  %s6 = sld [smem:[#allocation0]]
  $region57: #{tpu_custom_call.1} parent=0
    _
  %s8 = ssub.s32 1, %s6
  %s9 = scalar_select 0, %s8, %s6
  %11 = dma.hbm_to_smem %s0, 32, [#allocation3], [#allocation2]
  %12 = dma.done [#allocation2], 32
  %13 = sfence
  $region1: #{tpu_custom_call.1} parent=0
    #allocation4 [shape = 'u8[4096]{0}', space=vmem, size = 0x1000, scoped, tag = 'input window, operand 1']
    #allocation5 [shape = 's32[2]{0}', space=sflag, size = 0x8, scoped, tag = 'scoped memory for tpu_custom_call.1']
    #allocation6 [shape = 's32[2]{0}', space=sflag, size = 0x8, scoped, tag = 'scoped memory for tpu_custom_call.1']
    #allocation7 [shape = 'u8[4096]{0}', space=vmem, size = 0x1000, scoped, tag = 'input window, operand 2']
    #allocation8 [shape = 's32[2]{0}', space=sflag, size = 0x8, scoped, tag = 'scoped memory for tpu_custom_call.1']
    #allocation9 [shape = 'u8[4096]{0}', space=vmem, size = 0x1000, scoped, tag = 'output window, operand 0']
    %14 = vsyncpa [#allocation5], 0
    %s15 = scalar_lea.sflag [#allocation5], 1
    %16 = vsyncpa %s15, 0
    %17 = vsyncpa [#allocation8], 0
    %s18 = scalar_lea.sflag [#allocation8], 1
    %19 = vsyncpa %s18, 0
    %20 = vsyncpa [#allocation6], 0
    %s21 = scalar_lea.sflag [#allocation6], 1
    %22 = vsyncpa %s21, 0
    loop: start=0, step=1, limit=6
    $region2: #{tpu_custom_call.1} parent=1 // loop_pre_header
      _
    $region3: #{tpu_custom_call.1} parent=1 // loop_header
      %s24 = sphi 0, %s28
      %p25 = scmp.ge.s32.totalorder %s24, 6
      %s31 = sphi 0, %s43
      %s32 = sphi 0, %s39
      %s33 = sphi 0, %s31
      %s34 = sphi 0, %s32
      %s35 = sphi 0, %s33
      %s36 = sphi 0, %s34
      %s48 = sphi 0, %s50
      %s51 = sphi 0, %s48
      %s52 = sphi 0, %s51
      %s68 = sphi 0, %s52
      %s76 = sphi 0, %s78
      %s79 = sphi 0, %s76
      %s80 = sphi 0, %s79
      %s96 = sphi 0, %s80
      %s100 = sphi 0, %s100
      %s102 = sphi 0, %s100
      %s103 = sphi 0, %s102
      %s117 = sphi 0, %s103
      %s121 = sphi 0, %s121
      %s123 = sphi 0, %s121
      %s124 = sphi 0, %s123
      %s138 = sphi 0, %s124
      %s146 = sphi 0, %s148
      %s149 = sphi 0, %s146
      %s150 = sphi 0, %s149
      %s166 = sphi 0, %s150
    $region4: #{tpu_custom_call.1} parent=1 // loop_header_branch
      %27 = sbr.rel (%p25) target = $region8
    $region5: #{tpu_custom_call.1} parent=1 // loop_body
      %s29 = ssub.s32 %s24, 1
      %s30 = ssub.s32 %s24, 2
      %s37 = sadd.s32 1, %s32
      %p38 = scmp.ge.s32.totalorder %s37, 2
      %s39 = scalar_select %p38, 0, %s37
      %s40 = sadd.s32 1, %s31
      %s41 = scalar_select %p38, %s40, %s31
      %p42 = scmp.ge.s32.totalorder %s41, 2
      %s43 = scalar_select %p42, 0, %s41
      %s44 = ssub.s32 %s31, %s43
      %s45 = ssub.s32 %s32, %s39
      %s46 = sor.u32 %s44, %s45
      %p47 = scmp.eq.s32.totalorder %s46, 0
      %s49 = sadd.s32 %s48, 1
      %s50 = scalar_select %p47, %s48, %s49
      %p53 = pneg %p47
      %p54 = scmp.eq.s32.totalorder %s24, 3
      %p55 = por %p53, %p54
      %p56 = scmp.ne.s32.totalorder %s48, %s51
      %p57 = scmp.eq.s32.totalorder %s24, 0
      %p58 = por %p56, %p57
      %p59 = scmp.ne.s32.totalorder %s48, %s51
      %p60 = scmp.eq.s32.totalorder %s29, 3
      %p61 = por %p59, %p60
      %p62 = scmp.ne.s32.totalorder %s51, %s52
      %p63 = scmp.eq.s32.totalorder %s29, 0
      %p64 = por %p62, %p63
      %p65 = scmp.ne.s32.totalorder %s51, %s52
      %p66 = scmp.eq.s32.totalorder %s30, 3
      %p67 = por %p65, %p66
      %p69 = scmp.ne.s32.totalorder %s52, %s68
      %p70 = scmp.eq.s32.totalorder %s30, 0
      %p71 = por %p69, %p70
      %s72 = ssub.s32 %s31, %s43
      %s73 = ssub.s32 %s32, %s39
      %s74 = sor.u32 %s72, %s73
      %p75 = scmp.eq.s32.totalorder %s74, 0
      %s77 = sadd.s32 %s76, 1
      %s78 = scalar_select %p75, %s76, %s77
      %p81 = pneg %p75
      %p82 = scmp.eq.s32.totalorder %s24, 3
      %p83 = por %p81, %p82
      %p84 = scmp.ne.s32.totalorder %s76, %s79
      %p85 = scmp.eq.s32.totalorder %s24, 0
      %p86 = por %p84, %p85
      %p87 = scmp.ne.s32.totalorder %s76, %s79
      %p88 = scmp.eq.s32.totalorder %s29, 3
      %p89 = por %p87, %p88
      %p90 = scmp.ne.s32.totalorder %s79, %s80
      %p91 = scmp.eq.s32.totalorder %s29, 0
      %p92 = por %p90, %p91
      %p93 = scmp.ne.s32.totalorder %s79, %s80
      %p94 = scmp.eq.s32.totalorder %s30, 3
      %p95 = por %p93, %p94
      %p97 = scmp.ne.s32.totalorder %s80, %s96
      %p98 = scmp.eq.s32.totalorder %s30, 0
      %p99 = por %p97, %p98
      %s101 = sadd.s32 %s100, 1
      %p104 = scmp.eq.s32.totalorder %s24, 3
      %p105 = scmp.ne.s32.totalorder %s100, %s102
      %p106 = scmp.eq.s32.totalorder %s24, 0
      %p107 = por %p105, %p106
      %p108 = scmp.ne.s32.totalorder %s100, %s102
      %p109 = scmp.eq.s32.totalorder %s29, 3
      %p110 = por %p108, %p109
      %p111 = scmp.ne.s32.totalorder %s102, %s103
      %p112 = scmp.eq.s32.totalorder %s29, 0
      %p113 = por %p111, %p112
      %p114 = scmp.ne.s32.totalorder %s102, %s103
      %p115 = scmp.eq.s32.totalorder %s30, 3
      %p116 = por %p114, %p115
      %p118 = scmp.ne.s32.totalorder %s103, %s117
      %p119 = scmp.eq.s32.totalorder %s30, 0
      %p120 = por %p118, %p119
      %s122 = sadd.s32 %s121, 1
      %p125 = scmp.eq.s32.totalorder %s24, 3
      %p126 = scmp.ne.s32.totalorder %s121, %s123
      %p127 = scmp.eq.s32.totalorder %s24, 0
      %p128 = por %p126, %p127
      %p129 = scmp.ne.s32.totalorder %s121, %s123
      %p130 = scmp.eq.s32.totalorder %s29, 3
      %p131 = por %p129, %p130
      %p132 = scmp.ne.s32.totalorder %s123, %s124
      %p133 = scmp.eq.s32.totalorder %s29, 0
      %p134 = por %p132, %p133
      %p135 = scmp.ne.s32.totalorder %s123, %s124
      %p136 = scmp.eq.s32.totalorder %s30, 3
      %p137 = por %p135, %p136
      %p139 = scmp.ne.s32.totalorder %s124, %s138
      %p140 = scmp.eq.s32.totalorder %s30, 0
      %p141 = por %p139, %p140
      %s142 = ssub.s32 %s31, %s43
      %s143 = ssub.s32 %s32, %s39
      %s144 = sor.u32 %s142, %s143
      %p145 = scmp.eq.s32.totalorder %s144, 0
      %s147 = sadd.s32 %s146, 1
      %s148 = scalar_select %p145, %s146, %s147
      %p151 = pneg %p145
      %p152 = scmp.eq.s32.totalorder %s24, 3
      %p153 = por %p151, %p152
      %p154 = scmp.ne.s32.totalorder %s146, %s149
      %p155 = scmp.eq.s32.totalorder %s24, 0
      %p156 = por %p154, %p155
      %p157 = scmp.ne.s32.totalorder %s146, %s149
      %p158 = scmp.eq.s32.totalorder %s29, 3
      %p159 = por %p157, %p158
      %p160 = scmp.ne.s32.totalorder %s149, %s150
      %p161 = scmp.eq.s32.totalorder %s29, 0
      %p162 = por %p160, %p161
      %p163 = scmp.ne.s32.totalorder %s149, %s150
      %p164 = scmp.eq.s32.totalorder %s30, 3
      %p165 = por %p163, %p164
      %p167 = scmp.ne.s32.totalorder %s150, %s166
      %p168 = scmp.eq.s32.totalorder %s30, 0
      %p169 = por %p167, %p168
      %p170 = scmp.le.s32.totalorder 1, %s24
      %p171 = scmp.lt.s32.totalorder %s24, 5
      %p172 = pnand %p170, %p171
      %p173 = pneg %p172
      // Predicated region
      $region9: #{tpu_custom_call.1} parent=5 // pred_check
        _
      $region10: #{tpu_custom_call.1} parent=5 // pred_check_branch
        %175 = sbr.rel (%p172) target = $region12
      $region11: #{tpu_custom_call.1} parent=5 // pred_region
        %s176 = ssub.s32 %s24, 1
        // Predicated region
        $region13: #{tpu_custom_call.1} parent=11 // pred_check
          %p177 = pneg %p113
        $region14: #{tpu_custom_call.1} parent=11 // pred_check_branch
          %179 = sbr.rel (%p177) target = $region16
        $region15: #{tpu_custom_call.1} parent=11 // pred_region
          _
        $region16: #{tpu_custom_call.1} parent=11 // pred_fallthru
          _
        // Predicated region
        $region17: #{tpu_custom_call.1} parent=11 // pred_check
          %p180 = pneg %p134
        $region18: #{tpu_custom_call.1} parent=11 // pred_check_branch
          %182 = sbr.rel (%p180) target = $region20
        $region19: #{tpu_custom_call.1} parent=11 // pred_region
          _
        $region20: #{tpu_custom_call.1} parent=11 // pred_fallthru
          _
      $region12: #{tpu_custom_call.1} parent=5 // pred_fallthru
        _
      %p183 = scmp.lt.s32.totalorder %s24, 4
      // Predicated region
      $region21: #{tpu_custom_call.1} parent=5 // pred_check
        %p184 = pneg %p183
      $region22: #{tpu_custom_call.1} parent=5 // pred_check_branch
        %186 = sbr.rel (%p184) target = $region24
      $region23: #{tpu_custom_call.1} parent=5 // pred_region
        // Predicated region
        $region25: #{tpu_custom_call.1} parent=23 // pred_check
          %p187 = pneg %p58
        $region26: #{tpu_custom_call.1} parent=23 // pred_check_branch
          %189 = sbr.rel (%p187) target = $region28
        $region27: #{tpu_custom_call.1} parent=23 // pred_region
          %s190 = sand.u32 %s48, 1
          %s191 = scalar_lea.sflag [#allocation5], %s190
          %s192 = sand.u32 %s48, 1
          %s193 = smul.addr %s192, 4
          %s194 = scalar_lea.vmem [#allocation4], %s193
          %s196 = ssub.s32 64, 64
          %197 = vsyncadd %s191, %s196
          %s198 = smul.addr %s31, 2
          %s199 = sadd.s32 %s32, %s198
          %s200 = smul.addr %s199, 64
          %s201 = scalar_lea.hbm %s1, %s200
          %s203 = sshll.u32 %s194, 4
          %s204 = int_to_ptr.vmem [resolvable:$true] %s203
          %206 = dma.hbm_to_vmem [thread:$0]  %s201, 64, %s204, %s191
        $region28: #{tpu_custom_call.1} parent=23 // pred_fallthru
          _
        // Predicated region
        $region29: #{tpu_custom_call.1} parent=23 // pred_check
          %p207 = pneg %p86
        $region30: #{tpu_custom_call.1} parent=23 // pred_check_branch
          %209 = sbr.rel (%p207) target = $region32
        $region31: #{tpu_custom_call.1} parent=23 // pred_region
          %s210 = sand.u32 %s76, 1
          %s211 = scalar_lea.sflag [#allocation8], %s210
          %s212 = sand.u32 %s76, 1
          %s213 = smul.addr %s212, 4
          %s214 = scalar_lea.vmem [#allocation7], %s213
          %s216 = ssub.s32 64, 64
          %217 = vsyncadd %s211, %s216
          %s218 = smul.addr %s31, 2
          %s219 = sadd.s32 %s32, %s218
          %s220 = smul.addr %s219, 64
          %s221 = scalar_lea.hbm %s2, %s220
          %s223 = sshll.u32 %s214, 4
          %s224 = int_to_ptr.vmem [resolvable:$true] %s223
          %226 = dma.hbm_to_vmem [thread:$0]  %s221, 64, %s224, %s211
        $region32: #{tpu_custom_call.1} parent=23 // pred_fallthru
          _
      $region24: #{tpu_custom_call.1} parent=5 // pred_fallthru
        _
      %p227 = scmp.le.s32.totalorder 1, %s24
      %p228 = scmp.lt.s32.totalorder %s24, 5
      %p229 = pnand %p227, %p228
      %p230 = pneg %p229
      // Predicated region
      $region33: #{tpu_custom_call.1} parent=5 // pred_check
        _
      $region34: #{tpu_custom_call.1} parent=5 // pred_check_branch
        %232 = sbr.rel (%p229) target = $region36
      $region35: #{tpu_custom_call.1} parent=5 // pred_region
        %s233 = ssub.s32 %s24, 1
        %s234 = sand.u32 %s51, 1
        %s235 = scalar_lea.sflag [#allocation5], %s234
        %s236 = sand.u32 %s51, 1
        %s237 = smul.addr %s236, 4
        %s238 = scalar_lea.vmem [#allocation4], %s237
        // Predicated region
        $region37: #{tpu_custom_call.1} parent=35 // pred_check
          %p239 = pneg %p64
        $region38: #{tpu_custom_call.1} parent=35 // pred_check_branch
          %241 = sbr.rel (%p239) target = $region40
        $region39: #{tpu_custom_call.1} parent=35 // pred_region
          %242 = dma.done %s235, 64
        $region40: #{tpu_custom_call.1} parent=35 // pred_fallthru
          _
        %s243 = sand.u32 %s79, 1
        %s244 = scalar_lea.sflag [#allocation8], %s243
        %s245 = sand.u32 %s79, 1
        %s246 = smul.addr %s245, 4
        %s247 = scalar_lea.vmem [#allocation7], %s246
        // Predicated region
        $region41: #{tpu_custom_call.1} parent=35 // pred_check
          %p248 = pneg %p92
        $region42: #{tpu_custom_call.1} parent=35 // pred_check_branch
          %250 = sbr.rel (%p248) target = $region44
        $region43: #{tpu_custom_call.1} parent=35 // pred_region
          %251 = dma.done %s244, 64
        $region44: #{tpu_custom_call.1} parent=35 // pred_fallthru
          _
        %s252 = sand.u32 %s51, 1
        %s253 = scalar_lea.sflag [#allocation5], %s252
        %s254 = sand.u32 %s51, 1
        %s255 = smul.addr %s254, 4
        %s256 = scalar_lea.vmem [#allocation4], %s255
        %p257 = pneg %p64
        %p258 = pneg %p61
        %s259 = sand.u32 %s79, 1
        %s260 = scalar_lea.sflag [#allocation8], %s259
        %s261 = sand.u32 %s79, 1
        %s262 = smul.addr %s261, 4
        %s263 = scalar_lea.vmem [#allocation7], %s262
        %p264 = pneg %p92
        %p265 = pneg %p89
        %p266 = pneg %p113
        %p267 = pneg %p110
        %p268 = pneg %p134
        %p269 = pneg %p131
        %p270 = pneg %p162
        %p271 = pneg %p159
        %s272 = sand.u32 %s149, 1
        %s273 = scalar_lea.sflag [#allocation6], %s272
        %s274 = sand.u32 %s149, 1
        %s275 = smul.addr %s274, 4
        %s276 = scalar_lea.vmem [#allocation9], %s275
        %v277 = vld [vmem:[%s238] sm:$0xf]
        %v278 = vld [vmem:[%s247] sm:$0xf]
        %v279 = vld [vmem:[%s3] sm:$0x3]
        %v280 = vld [vmem:[%s4] sm:$0x3]
        %vm281 = vcmask 31744
        %v283 = vsel %vm281, %v280, 0
        %vm285 = vcmask 1043456
        %v287 = vsel %vm285, %v278, 0
        %289 = vmatprep.subr.mxu0 0.0
        %290 = vmatpush1.msra.mxu0 %v287
        %291 = vmatprep.subr.mxu0 0.0
        %292 = vmatpush1.msra.mxu0 0.0
        %293 = vmatprep.subr.mxu0 0.0
        %294 = vmatpush1.msra.mxu0 0.0
        %295 = vmatprep.subr.mxu0 0.0
        %296 = vmatpush1.msra.mxu0 0.0
        %297 = vmatprep.subr.mxu0 0.0
        %298 = vmatpush1.msra.mxu0 0.0
        %299 = vmatprep.subr.mxu0 0.0
        %300 = vmatpush1.msra.mxu0 0.0
        %301 = vmatprep.subr.mxu0 0.0
        %302 = vmatpush1.msra.mxu0 0.0
        %303 = vmatprep.subr.mxu0 0.0
        %304 = vmatpush1.msra.mxu0 0.0
        %305 = vmatprep.subr.mxu0 0.0
        %306 = vmatpush1.msra.mxu0 0.0
        %307 = vmatprep.subr.mxu0 0.0
        %308 = vmatpush1.msra.mxu0 0.0
        %309 = vmatprep.subr.mxu0 0.0
        %310 = vmatpush1.msra.mxu0 0.0
        %311 = vmatprep.subr.mxu0 0.0
        %312 = vmatpush1.msra.mxu0 0.0
        %313 = vmatprep.subr.mxu0 0.0
        %314 = vmatpush1.msra.mxu0 0.0
        %315 = vmatprep.subr.mxu0 0.0
        %316 = vmatpush1.msra.mxu0 0.0
        %317 = vmatprep.subr.mxu0 0.0
        %318 = vmatpush1.msra.mxu0 0.0
        %319 = vmatprep.subr.mxu0 0.0
        %320 = vmatpush1.msra.mxu0 0.0
        %321 = vmatprep.subr.mxu0 0.0
        %322 = vmatpush1.msra.mxu0 0.0
        %323 = vmatprep.subr.mxu0 0.0
        %324 = vmatpush1.msra.mxu0 0.0
        %325 = vmatprep.subr.mxu0 0.0
        %326 = vmatpush1.msra.mxu0 0.0
        %327 = vmatprep.subr.mxu0 0.0
        %328 = vmatpush1.msra.mxu0 0.0
        %329 = vmatprep.subr.mxu0 0.0
        %330 = vmatpush1.msra.mxu0 0.0
        %331 = vmatprep.subr.mxu0 0.0
        %332 = vmatpush1.msra.mxu0 0.0
        %333 = vmatprep.subr.mxu0 0.0
        %334 = vmatpush1.msra.mxu0 0.0
        %335 = vmatprep.subr.mxu0 0.0
        %336 = vmatpush1.msra.mxu0 0.0
        %337 = vmatprep.subr.mxu0 0.0
        %338 = vmatpush1.msra.mxu0 0.0
        %339 = vmatprep.subr.mxu0 0.0
        %340 = vmatpush1.msra.mxu0 0.0
        %341 = vmatprep.subr.mxu0 0.0
        %342 = vmatpush1.msra.mxu0 0.0
        %343 = vmatprep.subr.mxu0 0.0
        %344 = vmatpush1.msra.mxu0 0.0
        %345 = vmatprep.subr.mxu0 0.0
        %346 = vmatpush1.msra.mxu0 0.0
        %347 = vmatprep.subr.mxu0 0.0
        %348 = vmatpush1.msra.mxu0 0.0
        %349 = vmatprep.subr.mxu0 0.0
        %350 = vmatpush1.msra.mxu0 0.0
        %351 = vmatprep.subr.mxu0 0.0
        %352 = vmatpush1.msra.mxu0 0.0
        %353 = vmatprep.mubr.f32.mxu0 0.0
        %354 = vmatmul.mubr.f32.gmra.mrb[0].mxu0 %v283
        %v355 = vpop.f32.mrb[0].mxu0
        %v356 = vadd.f32 0.0, %v355
        %v357 = vpop.f32.mrb[0].mxu0
        %358 = vdwg.mxu0
        %v360 = vsel %vm281, %v279, 0
        %v363 = vsel %vm285, %v277, 0
        %365 = vmatprep.subr.mxu0 0.0
        %366 = vmatpush1.msra.mxu0 %v363
        %367 = vmatprep.subr.mxu0 0.0
        %368 = vmatpush1.msra.mxu0 0.0
        %369 = vmatprep.subr.mxu0 0.0
        %370 = vmatpush1.msra.mxu0 0.0
        %371 = vmatprep.subr.mxu0 0.0
        %372 = vmatpush1.msra.mxu0 0.0
        %373 = vmatprep.subr.mxu0 0.0
        %374 = vmatpush1.msra.mxu0 0.0
        %375 = vmatprep.subr.mxu0 0.0
        %376 = vmatpush1.msra.mxu0 0.0
        %377 = vmatprep.subr.mxu0 0.0
        %378 = vmatpush1.msra.mxu0 0.0
        %379 = vmatprep.subr.mxu0 0.0
        %380 = vmatpush1.msra.mxu0 0.0
        %381 = vmatprep.subr.mxu0 0.0
        %382 = vmatpush1.msra.mxu0 0.0
        %383 = vmatprep.subr.mxu0 0.0
        %384 = vmatpush1.msra.mxu0 0.0
        %385 = vmatprep.subr.mxu0 0.0
        %386 = vmatpush1.msra.mxu0 0.0
        %387 = vmatprep.subr.mxu0 0.0
        %388 = vmatpush1.msra.mxu0 0.0
        %389 = vmatprep.subr.mxu0 0.0
        %390 = vmatpush1.msra.mxu0 0.0
        %391 = vmatprep.subr.mxu0 0.0
        %392 = vmatpush1.msra.mxu0 0.0
        %393 = vmatprep.subr.mxu0 0.0
        %394 = vmatpush1.msra.mxu0 0.0
        %395 = vmatprep.subr.mxu0 0.0
        %396 = vmatpush1.msra.mxu0 0.0
        %397 = vmatprep.subr.mxu0 0.0
        %398 = vmatpush1.msra.mxu0 0.0
        %399 = vmatprep.subr.mxu0 0.0
        %400 = vmatpush1.msra.mxu0 0.0
        %401 = vmatprep.subr.mxu0 0.0
        %402 = vmatpush1.msra.mxu0 0.0
        %403 = vmatprep.subr.mxu0 0.0
        %404 = vmatpush1.msra.mxu0 0.0
        %405 = vmatprep.subr.mxu0 0.0
        %406 = vmatpush1.msra.mxu0 0.0
        %407 = vmatprep.subr.mxu0 0.0
        %408 = vmatpush1.msra.mxu0 0.0
        %409 = vmatprep.subr.mxu0 0.0
        %410 = vmatpush1.msra.mxu0 0.0
        %411 = vmatprep.subr.mxu0 0.0
        %412 = vmatpush1.msra.mxu0 0.0
        %413 = vmatprep.subr.mxu0 0.0
        %414 = vmatpush1.msra.mxu0 0.0
        %415 = vmatprep.subr.mxu0 0.0
        %416 = vmatpush1.msra.mxu0 0.0
        %417 = vmatprep.subr.mxu0 0.0
        %418 = vmatpush1.msra.mxu0 0.0
        %419 = vmatprep.subr.mxu0 0.0
        %420 = vmatpush1.msra.mxu0 0.0
        %421 = vmatprep.subr.mxu0 0.0
        %422 = vmatpush1.msra.mxu0 0.0
        %423 = vmatprep.subr.mxu0 0.0
        %424 = vmatpush1.msra.mxu0 0.0
        %425 = vmatprep.subr.mxu0 0.0
        %426 = vmatpush1.msra.mxu0 0.0
        %427 = vmatprep.subr.mxu0 0.0
        %428 = vmatpush1.msra.mxu0 0.0
        %429 = vmatprep.mubr.f32.mxu0 0.0
        %430 = vmatmul.mubr.f32.gmra.mrb[0].mxu0 %v360
        %v431 = vpop.f32.mrb[0].mxu0
        %v432 = vadd.f32 %v356, %v431
        %v433 = vpop.f32.mrb[0].mxu0
        %434 = vdwg.mxu0
        %s435 = smul.u32 %s33, 128
        %s436 = sld [smem:[#allocation3 + %s435]]
        %v437 = vstv %s436
        %v438 = vadd.f32 %v432, %v437
        %v439 = vxor.u32 %v438, 2147483648
        %v440 = vmul.f32 %v439, 1.442695
        %v441 = vpow.pop %v440
        %v442 = vadd.f32 %v441, 1.0
        %v443 = vrcp.pop %v442
        %v444 = vmul.f32 1.0, %v443
        %s445 = sadd.s32 %s435, 1
        %s446 = sld [smem:[#allocation3 + %s445]]
        %v447 = vstv %s446
        %v448 = vadd.f32 %v432, %v447
        %v449 = vxor.u32 %v448, 2147483648
        %v450 = vmul.f32 %v449, 1.442695
        %v451 = vpow.pop %v450
        %v452 = vadd.f32 %v451, 1.0
        %v453 = vrcp.pop %v452
        %v454 = vmul.f32 1.0, %v453
        %v455 = vlaneseq
        %v456 = vshrl.u32 %v455, 7
        %v457 = vsub.s32 0, %v456
        %v458 = vrot.slane %v444, %v457
        %v459 = vmul.f32 %v277, %v458
        %v460 = vlaneseq
        %v461 = vshrl.u32 %v460, 7
        %v462 = vsub.s32 1, %v461
        %v463 = vrot.slane %v454, %v462
        %v464 = vmul.f32 %v278, %v463
        %v465 = vadd.f32 %v459, %v464
        %466 = vst [vmem:[%s276] sm:$0xf] %v465
        %s467 = sand.u32 %s149, 1
        %s468 = scalar_lea.sflag [#allocation6], %s467
        %s469 = sand.u32 %s149, 1
        %s470 = smul.addr %s469, 4
        %s471 = scalar_lea.vmem [#allocation9], %s470
        // Predicated region
        $region45: #{tpu_custom_call.1} parent=35 // pred_check
          %p472 = pneg %p159
        $region46: #{tpu_custom_call.1} parent=35 // pred_check_branch
          %474 = sbr.rel (%p472) target = $region48
        $region47: #{tpu_custom_call.1} parent=35 // pred_region
          %s476 = ssub.s32 64, 64
          %477 = vsyncadd %s468, %s476
          %s478 = smul.addr %s33, 2
          %s479 = sadd.s32 %s34, %s478
          %s480 = smul.addr %s479, 64
          %s481 = scalar_lea.hbm %s5, %s480
          %s483 = sshll.u32 %s471, 4
          %s484 = int_to_ptr.vmem [resolvable:$true] %s483
          %486 = dma.vmem_to_hbm [thread:$0]  %s484, 64, %s481, %s468
        $region48: #{tpu_custom_call.1} parent=35 // pred_fallthru
          _
      $region36: #{tpu_custom_call.1} parent=5 // pred_fallthru
        _
      %p487 = scmp.le.s32.totalorder 2, %s24
      // Predicated region
      $region49: #{tpu_custom_call.1} parent=5 // pred_check
        %p488 = pneg %p487
      $region50: #{tpu_custom_call.1} parent=5 // pred_check_branch
        %490 = sbr.rel (%p488) target = $region52
      $region51: #{tpu_custom_call.1} parent=5 // pred_region
        %s491 = ssub.s32 %s24, 2
        // Predicated region
        $region53: #{tpu_custom_call.1} parent=51 // pred_check
          %p492 = pneg %p165
        $region54: #{tpu_custom_call.1} parent=51 // pred_check_branch
          %494 = sbr.rel (%p492) target = $region56
        $region55: #{tpu_custom_call.1} parent=51 // pred_region
          %s495 = sand.u32 %s150, 1
          %s496 = scalar_lea.sflag [#allocation6], %s495
          %s497 = sand.u32 %s150, 1
          %s498 = smul.addr %s497, 4
          %s499 = scalar_lea.vmem [#allocation9], %s498
          %500 = dma.done %s496, 64
        $region56: #{tpu_custom_call.1} parent=51 // pred_fallthru
          _
      $region52: #{tpu_custom_call.1} parent=5 // pred_fallthru
        _
    $region6: #{tpu_custom_call.1} parent=1 // loop_footer
      %s28 = sadd.s32 1, %s24
    $region7: #{tpu_custom_call.1} parent=1 // loop_footer_branch
      %23 = sbr.rel target = $region3
    $region8: #{tpu_custom_call.1} parent=1 // loop_exit
      _
    %501 = vsyncpa [#allocation5], 1
    %s502 = scalar_lea.sflag [#allocation5], 1
    %503 = vsyncpa %s502, 1
    %504 = vsyncpa [#allocation8], 1
    %s505 = scalar_lea.sflag [#allocation8], 1
    %506 = vsyncpa %s505, 1
    %507 = vsyncpa [#allocation6], 1
    %s508 = scalar_lea.sflag [#allocation6], 1
    %509 = vsyncpa %s508, 1

</llo_original>
